<compile_context>
chip_gen: v6e
topology: v6e:2x2x1
jax: 0.10.0
libtpu: 0.0.40
codegen_flags: <defaults>
</compile_context>

<pallas_src>
import functools

import jax
import jax.numpy as jnp
from jax.experimental import pallas as pl
from jax.experimental.pallas import tpu as pltpu


def _round_up(x, m):
    return (x + m - 1) // m * m


def _phase1_kernel(z_ref, w1_ref, b1_ref, w2_ref, part_ref, *, n_valid,
                   apply_mask):
    # z_ref: (M, tile_n, D) bf16    w1: (D, Hp) bf16
    # b1:    (1, Hp) f32            w2: (1, Hp) f32
    # part_ref (out, per-block): (1, M, 1) f32 partial score sums.
    m_paths, tile_n, d = z_ref.shape
    hp = w1_ref.shape[1]

    # One lane-dense bf16 MXU matmul for all metapaths at once (free reshape:
    # tile_n is a multiple of 8, so collapsing the leading dims is relabeling).
    zz = z_ref[...].reshape(m_paths * tile_n, d)
    h = jnp.tanh(
        jnp.dot(zz, w1_ref[...], preferred_element_type=jnp.float32)
        + b1_ref[...])                                     # (M*tile_n, Hp) f32
    h = h.reshape(m_paths, tile_n, hp)                     # free split

    if apply_mask:
        # Only padded node rows (last block) must not contribute to the mean.
        i = pl.program_id(0)
        rows = i * tile_n + jax.lax.broadcasted_iota(
            jnp.int32, (1, tile_n, 1), 1)
        h = jnp.where(rows < n_valid, h, 0.0)

    # Reduce over the node axis first, then one small multiply by w2 and a
    # lane reduce (algebraically identical to per-row scores summed over n).
    hsum = jnp.sum(h, axis=1)                              # (M, Hp)
    psum = jnp.sum(hsum * w2_ref[...], axis=-1, keepdims=True)   # (M, 1)
    part_ref[...] = psum.reshape(1, m_paths, 1)


def _phase2_kernel(beta_ref, z_ref, out_ref):
    # beta: (M, 1) f32   z: (M, tile_n, D) bf16   out: (tile_n, D) f32
    m_paths = z_ref.shape[0]
    beta = beta_ref[...]                                   # (M, 1)
    acc = z_ref[0].astype(jnp.float32) * beta[0:1, :]      # (1,1) broadcast
    for m in range(1, m_paths):
        acc = acc + z_ref[m].astype(jnp.float32) * beta[m:m + 1, :]
    out_ref[...] = acc


def semantic_attention(z, w1, b1, w2, *, tile_n=None):
    """z: (N, M, D); w1: (D, H); b1: (H,); w2: (H, 1). Returns (N, D) f32."""
    N, M, D = z.shape
    H = w1.shape[1]
    Hp = _round_up(H, 128)

    # Node tile: ~6 MiB per bf16 z buffer (double-buffered by the pipeline),
    # capped so it stays well inside v7x's 64 MiB VMEM even for large M*D.
    if tile_n is None:
        budget = 6 * 1024 * 1024
        tile_n = budget // max(1, M * D * 2)
        tile_n = min(1024, max(16, tile_n))
    tile_n = max(8, (tile_n // 8) * 8)
    tile_n = min(tile_n, _round_up(N, 8))
    Np = _round_up(N, tile_n)
    n_blocks = Np // tile_n

    # Metapath-major bf16 staging (single fused transpose+cast+pad in XLA).
    # TODO(synk): a full HANLayer would stack the per-metapath GAT outputs
    # metapath-major in bf16 directly, removing this staging pass entirely.
    z_mm = jnp.transpose(z, (1, 0, 2)).astype(jnp.bfloat16)     # (M, N, D)
    if Np != N:
        z_mm = jnp.pad(z_mm, ((0, 0), (0, Np - N), (0, 0)))

    w1_p = jnp.pad(w1, ((0, 0), (0, Hp - H))).astype(jnp.bfloat16)   # (D, Hp)
    b1_p = jnp.pad(b1.astype(jnp.float32).reshape(1, H), ((0, 0), (0, Hp - H)))
    w2_p = jnp.pad(w2.astype(jnp.float32).reshape(1, H), ((0, 0), (0, Hp - H)))

    cparams = pltpu.CompilerParams(
        dimension_semantics=("parallel",),
        vmem_limit_bytes=32 * 1024 * 1024)

    # ---- pass 1: per-block partial score sums (parallel over node blocks) ---
    p1 = functools.partial(_phase1_kernel, n_valid=N, apply_mask=(Np != N))
    parts = pl.pallas_call(
        p1,
        out_shape=jax.ShapeDtypeStruct((n_blocks, M, 1), jnp.float32),
        grid=(n_blocks,),
        in_specs=[
            pl.BlockSpec((M, tile_n, D), lambda i: (0, i, 0)),
            pl.BlockSpec((D, Hp), lambda i: (0, 0)),    # weights stay resident
            pl.BlockSpec((1, Hp), lambda i: (0, 0)),
            pl.BlockSpec((1, Hp), lambda i: (0, 0)),
        ],
        out_specs=pl.BlockSpec((1, M, 1), lambda i: (i, 0, 0)),
        compiler_params=cparams,
        cost_estimate=pl.CostEstimate(
            flops=2 * M * Np * D * Hp + 2 * M * Np * Hp,
            transcendentals=M * Np * Hp,
            bytes_accessed=2 * M * Np * D + 2 * D * Hp + 8 * Hp
            + 4 * n_blocks * M),
    )(z_mm, w1_p, b1_p, w2_p)

    # ---- tiny mean + softmax over metapaths in plain JAX --------------------
    w_mean = jnp.sum(parts, axis=0) / N                    # (M, 1)
    beta = jax.nn.softmax(w_mean, axis=0)                  # (M, 1)

    # ---- pass 2: out[n] = sum_m beta[m] * z[m, n] ----------------------------
    out_p = pl.pallas_call(
        _phase2_kernel,
        out_shape=jax.ShapeDtypeStruct((Np, D), jnp.float32),
        grid=(n_blocks,),
        in_specs=[
            pl.BlockSpec((M, 1), lambda i: (0, 0)),
            pl.BlockSpec((M, tile_n, D), lambda i: (0, i, 0)),
        ],
        out_specs=pl.BlockSpec((tile_n, D), lambda i: (i, 0)),
        compiler_params=cparams,
        cost_estimate=pl.CostEstimate(
            flops=2 * M * Np * D,
            transcendentals=0,
            bytes_accessed=2 * M * Np * D + 4 * Np * D + 4 * M),
    )(beta, z_mm)

    return out_p[:N]


def _reference(z, w1, b1, w2):
    # Pure-JAX f32 reference matching the PyTorch forward.
    w = jnp.tanh(z @ w1 + b1) @ w2      # (N, M, 1)
    w = w.mean(0)                       # (M, 1)
    beta = jax.nn.softmax(w, axis=0)    # (M, 1)
    return (beta[None] * z).sum(1)      # (N, D)


if __name__ == "__main__":
    # Small shapes consistent with the module: N nodes, M metapaths,
    # D = out_size * num_heads, hidden = 32.  N is not a multiple of the node
    # tile so the padded-row masking and multi-block partial sums get exercised.
    N, M, D, H = 24, 4, 16, 32

    key = jax.random.PRNGKey(0)
    kz, k1, kb, k2 = jax.random.split(key, 4)
    z = jax.random.normal(kz, (N, M, D), dtype=jnp.float32)
    w1 = jax.random.normal(k1, (D, H), dtype=jnp.float32) * 0.1  # Linear(D,H) weight
    b1 = jax.random.normal(kb, (H,), dtype=jnp.float32) * 0.1    # Linear(D,H) bias
    w2 = jax.random.normal(k2, (H, 1), dtype=jnp.float32) * 0.1  # Linear(H,1,no bias)

    out = semantic_attention(z, w1, b1, w2, tile_n=16)
    out = jax.block_until_ready(out)

    ref = _reference(z, w1, b1, w2)
    assert out.shape == (N, D)
    # z is stored / matmul'd in bf16 (f32 accumulation), so compare at a
    # bf16-appropriate tolerance against the f32 reference.
    assert jnp.allclose(out, ref, atol=2e-2, rtol=2e-2), (
        f"max abs diff = {jnp.max(jnp.abs(out - ref))}")

    print("KERNEL_OK")
</pallas_src>

<mosaic_0001>
module attributes {stable_mosaic.version = 11 : i64} {
  func.func @_phase1_kernel(%arg0: i32, %arg1: memref<4x16x16xbf16, #tpu.memory_space<vmem>>, %arg2: memref<16x128xbf16, #tpu.memory_space<vmem>>, %arg3: memref<1x128xf32, #tpu.memory_space<vmem>>, %arg4: memref<1x128xf32, #tpu.memory_space<vmem>>, %arg5: memref<1x4x1xf32, #tpu.memory_space<vmem>>) attributes {dimension_semantics = [#tpu.dimension_semantics<parallel>], iteration_bounds = array<i64: 2>, scalar_prefetch = 0 : i64, scratch_operands = 0 : i64, tpu.core_type = #tpu.core_type<tc>, window_params = [{transform_indices = @transform_0, window_bounds = array<i64: 4, 16, 16>}, {pipeline_mode = #tpu.pipeline_mode<synchronous>, transform_indices = @transform_1, window_bounds = array<i64: 16, 128>}, {pipeline_mode = #tpu.pipeline_mode<synchronous>, transform_indices = @transform_2, window_bounds = array<i64: 1, 128>}, {pipeline_mode = #tpu.pipeline_mode<synchronous>, transform_indices = @transform_3, window_bounds = array<i64: 1, 128>}, {transform_indices = @transform_4, window_bounds = array<i64: 1, 4, 1>}]} {
    %c0 = arith.constant 0 : index
    %c0_0 = arith.constant 0 : index
    %c0_1 = arith.constant 0 : index
    %0 = vector.load %arg1[%c0, %c0_0, %c0_1] : memref<4x16x16xbf16, #tpu.memory_space<vmem>>, vector<4x16x16xbf16>
    %1 = vector.shape_cast %0 : vector<4x16x16xbf16> to vector<64x16xbf16>
    %c0_2 = arith.constant 0 : index
    %c0_3 = arith.constant 0 : index
    %2 = vector.load %arg2[%c0_2, %c0_3] : memref<16x128xbf16, #tpu.memory_space<vmem>>, vector<16x128xbf16>
    %cst = arith.constant dense<0.000000e+00> : vector<64x128xf32>
    %3 = tpu.matmul %1, %2, %cst {dimension_numbers = #tpu.dot_dimension_numbers<[1], [0], [0], [1], [0, 0, 1, 1], [], []>} : vector<64x16xbf16>, vector<16x128xbf16>, vector<64x128xf32> -> vector<64x128xf32>
    %c0_4 = arith.constant 0 : index
    %c0_5 = arith.constant 0 : index
    %4 = vector.load %arg3[%c0_4, %c0_5] : memref<1x128xf32, #tpu.memory_space<vmem>>, vector<1x128xf32>
    %5 = vector.broadcast %4 : vector<1x128xf32> to vector<64x128xf32>
    %6 = arith.addf %3, %5 : vector<64x128xf32>
    %7 = math.tanh %6 : vector<64x128xf32>
    %8 = vector.shape_cast %7 : vector<64x128xf32> to vector<4x16x128xf32>
    %c16_i32 = arith.constant 16 : i32
    %9 = arith.muli %arg0, %c16_i32 : i32
    %10 = tpu.iota {dimensions = array<i32: 1>} : vector<1x16x1xi32>
    %11 = vector.broadcast %9 : i32 to vector<1x16x1xi32>
    %12 = arith.addi %11, %10 : vector<1x16x1xi32>
    %c24_i32 = arith.constant 24 : i32
    %13 = vector.broadcast %c24_i32 : i32 to vector<1x16x1xi32>
    %14 = arith.cmpi slt, %12, %13 : vector<1x16x1xi32>
    %cst_6 = arith.constant 0.000000e+00 : f32
    %15 = vector.shape_cast %14 : vector<1x16x1xi1> to vector<1x16x1xi1>
    %16 = vector.broadcast %15 : vector<1x16x1xi1> to vector<4x16x128xi1>
    %17 = vector.broadcast %cst_6 : f32 to vector<4x16x128xf32>
    %18 = arith.select %16, %8, %17 : vector<4x16x128xi1>, vector<4x16x128xf32>
    %cst_7 = arith.constant dense<0.000000e+00> : vector<4x128xf32>
    %19 = vector.multi_reduction <add>, %18, %cst_7 [1] : vector<4x16x128xf32> to vector<4x128xf32>
    %c0_8 = arith.constant 0 : index
    %c0_9 = arith.constant 0 : index
    %20 = vector.load %arg4[%c0_8, %c0_9] : memref<1x128xf32, #tpu.memory_space<vmem>>, vector<1x128xf32>
    %21 = vector.broadcast %20 : vector<1x128xf32> to vector<4x128xf32>
    %22 = arith.mulf %19, %21 : vector<4x128xf32>
    %cst_10 = arith.constant dense<0.000000e+00> : vector<4xf32>
    %23 = vector.multi_reduction <add>, %22, %cst_10 [1] : vector<4x128xf32> to vector<4xf32>
    %24 = vector.shape_cast %23 : vector<4xf32> to vector<4x1xf32>
    %25 = vector.shape_cast %24 : vector<4x1xf32> to vector<1x4x1xf32>
    %c0_11 = arith.constant 0 : index
    %c0_12 = arith.constant 0 : index
    %c0_13 = arith.constant 0 : index
    %26 = vector.load %arg5[%c0_11, %c0_12, %c0_13] : memref<1x4x1xf32, #tpu.memory_space<vmem>>, vector<1x4x1xf32>
    tpu.vector_store %arg5[%c0_11, %c0_12, %c0_13], %25 {strides = array<i32>} : memref<1x4x1xf32, #tpu.memory_space<vmem>>, vector<1x4x1xf32>,
    return
  }
  func.func @transform_0(%arg0: i32) -> (i32, i32, i32) {
    %c0_i32 = arith.constant 0 : i32
    %c0_i32_0 = arith.constant 0 : i32
    %c0_i32_1 = arith.constant 0 : i32
    return %c0_i32, %arg0, %c0_i32_0 : i32, i32, i32
  }
  func.func @transform_1(%arg0: i32) -> (i32, i32) {
    %c0_i32 = arith.constant 0 : i32
    %c0_i32_0 = arith.constant 0 : i32
    %c0_i32_1 = arith.constant 0 : i32
    return %c0_i32, %c0_i32_0 : i32, i32
  }
  func.func @transform_2(%arg0: i32) -> (i32, i32) {
    %c0_i32 = arith.constant 0 : i32
    %c0_i32_0 = arith.constant 0 : i32
    %c0_i32_1 = arith.constant 0 : i32
    return %c0_i32, %c0_i32_0 : i32, i32
  }
  func.func @transform_3(%arg0: i32) -> (i32, i32) {
    %c0_i32 = arith.constant 0 : i32
    %c0_i32_0 = arith.constant 0 : i32
    %c0_i32_1 = arith.constant 0 : i32
    return %c0_i32, %c0_i32_0 : i32, i32
  }
  func.func @transform_4(%arg0: i32) -> (i32, i32, i32) {
    %c0_i32 = arith.constant 0 : i32
    %c0_i32_0 = arith.constant 0 : i32
    %c0_i32_1 = arith.constant 0 : i32
    return %arg0, %c0_i32, %c0_i32_0 : i32, i32, i32
  }
}

</mosaic_0001>

<llo_original>
// kernel: tpu_custom_call.1
$region0: #{tpu_custom_call.1}
  #allocation0 [shape = 'u32[]', space=smem, size = 0x4, offset = 0x4, fixed_abs, tag = 'smem constant byte address 0x4 - core index']
  #allocation1 [shape = 'u32[144,128]{1,0:T(1,128)}', space=vmem, size = 0x12000, scoped, tag = 'internal scratch']
  %s0 = inlined_call_operand.vmem [shape: bf16[4,32,16], index: 0, kind: input, shape index: {}]
  %s1 = inlined_call_operand.vmem [shape: bf16[16,128], index: 1, kind: input, shape index: {}]
  %s2 = inlined_call_operand.vmem [shape: f32[1,128], index: 2, kind: input, shape index: {}]
  %s3 = inlined_call_operand.vmem [shape: f32[1,128], index: 3, kind: input, shape index: {}]
  %s4 = inlined_call_operand.vmem [shape: f32[2,4,1], index: 4, kind: output, shape index: {}]
  %s5 = sld [smem:[#allocation0]]
  $region90: #{tpu_custom_call.1} parent=0
    _
  %s7 = ssub.s32 1, %s5
  %s8 = scalar_select 0, %s7, %s5
  $region1: #{tpu_custom_call.1} parent=0
    #allocation2 [shape = 'u8[32768]{0}', space=vmem, size = 0x8000, scoped, tag = 'input window, operand 0']
    loop: start=0, step=1, limit=4
    $region2: #{tpu_custom_call.1} parent=1 // loop_pre_header
      _
    $region3: #{tpu_custom_call.1} parent=1 // loop_header
      %s10 = sphi 0, %s14
      %p11 = scmp.ge.s32.totalorder %s10, 4
      %s20 = sphi 0, %s22
      %s23 = sphi 0, %s20
      %s24 = sphi 0, %s23
      %s40 = sphi 0, %s24
      %s44 = sphi 0, %s44
      %s46 = sphi 0, %s44
      %s47 = sphi 0, %s46
      %s61 = sphi 0, %s47
      %s65 = sphi 0, %s65
      %s67 = sphi 0, %s65
      %s68 = sphi 0, %s67
      %s82 = sphi 0, %s68
      %s86 = sphi 0, %s86
      %s88 = sphi 0, %s86
      %s89 = sphi 0, %s88
      %s103 = sphi 0, %s89
      %s109 = sphi 0, %s111
      %s112 = sphi 0, %s109
      %s113 = sphi 0, %s112
      %s129 = sphi 0, %s113
    $region4: #{tpu_custom_call.1} parent=1 // loop_header_branch
      %13 = sbr.rel (%p11) target = $region8
    $region5: #{tpu_custom_call.1} parent=1 // loop_body
      %s15 = ssub.s32 %s10, 1
      %s16 = ssub.s32 %s10, 2
      %s17 = sadd.s32 %s10, 1
      %s18 = ssub.s32 %s10, %s17
      %p19 = scmp.eq.s32.totalorder %s18, 0
      %s21 = sadd.s32 %s20, 1
      %s22 = scalar_select %p19, %s20, %s21
      %p25 = pneg %p19
      %p26 = scmp.eq.s32.totalorder %s10, 1
      %p27 = por %p25, %p26
      %p28 = scmp.ne.s32.totalorder %s20, %s23
      %p29 = scmp.eq.s32.totalorder %s10, 0
      %p30 = por %p28, %p29
      %p31 = scmp.ne.s32.totalorder %s20, %s23
      %p32 = scmp.eq.s32.totalorder %s15, 1
      %p33 = por %p31, %p32
      %p34 = scmp.ne.s32.totalorder %s23, %s24
      %p35 = scmp.eq.s32.totalorder %s15, 0
      %p36 = por %p34, %p35
      %p37 = scmp.ne.s32.totalorder %s23, %s24
      %p38 = scmp.eq.s32.totalorder %s16, 1
      %p39 = por %p37, %p38
      %p41 = scmp.ne.s32.totalorder %s24, %s40
      %p42 = scmp.eq.s32.totalorder %s16, 0
      %p43 = por %p41, %p42
      %s45 = sadd.s32 %s44, 1
      %p48 = scmp.eq.s32.totalorder %s10, 1
      %p49 = scmp.ne.s32.totalorder %s44, %s46
      %p50 = scmp.eq.s32.totalorder %s10, 0
      %p51 = por %p49, %p50
      %p52 = scmp.ne.s32.totalorder %s44, %s46
      %p53 = scmp.eq.s32.totalorder %s15, 1
      %p54 = por %p52, %p53
      %p55 = scmp.ne.s32.totalorder %s46, %s47
      %p56 = scmp.eq.s32.totalorder %s15, 0
      %p57 = por %p55, %p56
      %p58 = scmp.ne.s32.totalorder %s46, %s47
      %p59 = scmp.eq.s32.totalorder %s16, 1
      %p60 = por %p58, %p59
      %p62 = scmp.ne.s32.totalorder %s47, %s61
      %p63 = scmp.eq.s32.totalorder %s16, 0
      %p64 = por %p62, %p63
      %s66 = sadd.s32 %s65, 1
      %p69 = scmp.eq.s32.totalorder %s10, 1
      %p70 = scmp.ne.s32.totalorder %s65, %s67
      %p71 = scmp.eq.s32.totalorder %s10, 0
      %p72 = por %p70, %p71
      %p73 = scmp.ne.s32.totalorder %s65, %s67
      %p74 = scmp.eq.s32.totalorder %s15, 1
      %p75 = por %p73, %p74
      %p76 = scmp.ne.s32.totalorder %s67, %s68
      %p77 = scmp.eq.s32.totalorder %s15, 0
      %p78 = por %p76, %p77
      %p79 = scmp.ne.s32.totalorder %s67, %s68
      %p80 = scmp.eq.s32.totalorder %s16, 1
      %p81 = por %p79, %p80
      %p83 = scmp.ne.s32.totalorder %s68, %s82
      %p84 = scmp.eq.s32.totalorder %s16, 0
      %p85 = por %p83, %p84
      %s87 = sadd.s32 %s86, 1
      %p90 = scmp.eq.s32.totalorder %s10, 1
      %p91 = scmp.ne.s32.totalorder %s86, %s88
      %p92 = scmp.eq.s32.totalorder %s10, 0
      %p93 = por %p91, %p92
      %p94 = scmp.ne.s32.totalorder %s86, %s88
      %p95 = scmp.eq.s32.totalorder %s15, 1
      %p96 = por %p94, %p95
      %p97 = scmp.ne.s32.totalorder %s88, %s89
      %p98 = scmp.eq.s32.totalorder %s15, 0
      %p99 = por %p97, %p98
      %p100 = scmp.ne.s32.totalorder %s88, %s89
      %p101 = scmp.eq.s32.totalorder %s16, 1
      %p102 = por %p100, %p101
      %p104 = scmp.ne.s32.totalorder %s89, %s103
      %p105 = scmp.eq.s32.totalorder %s16, 0
      %p106 = por %p104, %p105
      %s107 = ssub.s32 %s10, %s17
      %p108 = scmp.eq.s32.totalorder %s107, 0
      %s110 = sadd.s32 %s109, 1
      %s111 = scalar_select %p108, %s109, %s110
      %p114 = pneg %p108
      %p115 = scmp.eq.s32.totalorder %s10, 1
      %p116 = por %p114, %p115
      %p117 = scmp.ne.s32.totalorder %s109, %s112
      %p118 = scmp.eq.s32.totalorder %s10, 0
      %p119 = por %p117, %p118
      %p120 = scmp.ne.s32.totalorder %s109, %s112
      %p121 = scmp.eq.s32.totalorder %s15, 1
      %p122 = por %p120, %p121
      %p123 = scmp.ne.s32.totalorder %s112, %s113
      %p124 = scmp.eq.s32.totalorder %s15, 0
      %p125 = por %p123, %p124
      %p126 = scmp.ne.s32.totalorder %s112, %s113
      %p127 = scmp.eq.s32.totalorder %s16, 1
      %p128 = por %p126, %p127
      %p130 = scmp.ne.s32.totalorder %s113, %s129
      %p131 = scmp.eq.s32.totalorder %s16, 0
      %p132 = por %p130, %p131
      %p133 = scmp.le.s32.totalorder 1, %s10
      %p134 = scmp.lt.s32.totalorder %s10, 3
      %p135 = pnand %p133, %p134
      %p136 = pneg %p135
      // Predicated region
      $region9: #{tpu_custom_call.1} parent=5 // pred_check
        _
      $region10: #{tpu_custom_call.1} parent=5 // pred_check_branch
        %138 = sbr.rel (%p135) target = $region12
      $region11: #{tpu_custom_call.1} parent=5 // pred_region
        %s139 = ssub.s32 %s10, 1
        // Predicated region
        $region13: #{tpu_custom_call.1} parent=11 // pred_check
          %p140 = pneg %p57
        $region14: #{tpu_custom_call.1} parent=11 // pred_check_branch
          %142 = sbr.rel (%p140) target = $region16
        $region15: #{tpu_custom_call.1} parent=11 // pred_region
          _
        $region16: #{tpu_custom_call.1} parent=11 // pred_fallthru
          _
        // Predicated region
        $region17: #{tpu_custom_call.1} parent=11 // pred_check
          %p143 = pneg %p78
        $region18: #{tpu_custom_call.1} parent=11 // pred_check_branch
          %145 = sbr.rel (%p143) target = $region20
        $region19: #{tpu_custom_call.1} parent=11 // pred_region
          _
        $region20: #{tpu_custom_call.1} parent=11 // pred_fallthru
          _
        // Predicated region
        $region21: #{tpu_custom_call.1} parent=11 // pred_check
          %p146 = pneg %p99
        $region22: #{tpu_custom_call.1} parent=11 // pred_check_branch
          %148 = sbr.rel (%p146) target = $region24
        $region23: #{tpu_custom_call.1} parent=11 // pred_region
          _
        $region24: #{tpu_custom_call.1} parent=11 // pred_fallthru
          _
      $region12: #{tpu_custom_call.1} parent=5 // pred_fallthru
        _
      %p149 = scmp.lt.s32.totalorder %s10, 2
      // Predicated region
      $region25: #{tpu_custom_call.1} parent=5 // pred_check
        %p150 = pneg %p149
      $region26: #{tpu_custom_call.1} parent=5 // pred_check_branch
        %152 = sbr.rel (%p150) target = $region28
      $region27: #{tpu_custom_call.1} parent=5 // pred_region
        // Predicated region
        $region29: #{tpu_custom_call.1} parent=27 // pred_check
          %p153 = pneg %p30
        $region30: #{tpu_custom_call.1} parent=27 // pred_check_branch
          %155 = sbr.rel (%p153) target = $region32
        $region31: #{tpu_custom_call.1} parent=27 // pred_region
          %s156 = sand.u32 %s20, 1
          %s157 = sand.u32 %s20, 1
          %s158 = smul.addr %s157, 32
          %s159 = scalar_lea.vmem [#allocation2], %s158
          %s160 = smul.u32 2, %s10
          %s161 = smul.addr %s160, 4
          %s162 = scalar_lea.vmem %s0, %s161
          // Predicated region
          $region33: #{tpu_custom_call.1} parent=31 // pred_check
            _
          $region34: #{tpu_custom_call.1} parent=31 // pred_check_branch
            %164 = sbr.rel (0) target = $region36
          $region35: #{tpu_custom_call.1} parent=31 // pred_region
            // Predicated region
            $region37: #{tpu_custom_call.1} parent=35 // pred_check
              _
            $region38: #{tpu_custom_call.1} parent=35 // pred_check_branch
              %166 = sbr.rel target = $region40
            $region39: #{tpu_custom_call.1} parent=35 // pred_region
              // Predicated region
              $region52: #{tpu_custom_call.1} parent=39 // pred_check
                _
              $region53: #{tpu_custom_call.1} parent=39 // pred_check_branch
                %196 = sbr.rel (0) target = $region55
              $region54: #{tpu_custom_call.1} parent=39 // pred_region
                loop: start=0, step=1, limit=1
                $region56: #{tpu_custom_call.1} parent=54 // loop_pre_header
                  _
                $region57: #{tpu_custom_call.1} parent=54 // loop_header
                  %s198 = sphi 0, %s202
                  %p199 = scmp.ge.s32.totalorder %s198, 1
                  %s203 = sphi %s162, %s162
                  %s204 = sphi %s159, %s159
                $region58: #{tpu_custom_call.1} parent=54 // loop_header_branch
                  %201 = sbr.rel (%p199) target = $region62
                $region59: #{tpu_custom_call.1} parent=54 // loop_body
                  _
                $region60: #{tpu_custom_call.1} parent=54 // loop_footer
                  %s202 = sadd.s32 1, %s198
                $region61: #{tpu_custom_call.1} parent=54 // loop_footer_branch
                  %197 = sbr.rel target = $region57
                $region62: #{tpu_custom_call.1} parent=54 // loop_exit
                  _
                %s206 = ssub.s32 16, 1
                loop: start=0, step=1, limit=1
                $region63: #{tpu_custom_call.1} parent=54 // loop_pre_header
                  _
                $region64: #{tpu_custom_call.1} parent=54 // loop_header
                  %s208 = sphi 0, %s212
                  %p209 = scmp.ge.s32.totalorder %s208, 1
                  %s213 = sphi %s162, %s162
                  %s214 = sphi %s159, %s159
                $region65: #{tpu_custom_call.1} parent=54 // loop_header_branch
                  %211 = sbr.rel (%p209) target = $region69
                $region66: #{tpu_custom_call.1} parent=54 // loop_body
                  %v215 = vld [vmem:[%s213] sm:%s206]
                  %216 = vst [vmem:[%s214] sm:%s206] %v215
                  %v217 = vld [vmem:[%s213 + $0x4] sm:%s206]
                  %218 = vst [vmem:[%s214 + $0x4] sm:%s206] %v217
                  %v219 = vld [vmem:[%s213 + $0x10] sm:%s206]
                  %220 = vst [vmem:[%s214 + $0x8] sm:%s206] %v219
                  %v221 = vld [vmem:[%s213 + $0x14] sm:%s206]
                  %222 = vst [vmem:[%s214 + $0xc] sm:%s206] %v221
                  %v223 = vld [vmem:[%s213 + $0x20] sm:%s206]
                  %224 = vst [vmem:[%s214 + $0x10] sm:%s206] %v223
                  %v225 = vld [vmem:[%s213 + $0x24] sm:%s206]
                  %226 = vst [vmem:[%s214 + $0x14] sm:%s206] %v225
                  %v227 = vld [vmem:[%s213 + $0x30] sm:%s206]
                  %228 = vst [vmem:[%s214 + $0x18] sm:%s206] %v227
                  %v229 = vld [vmem:[%s213 + $0x34] sm:%s206]
                  %230 = vst [vmem:[%s214 + $0x1c] sm:%s206] %v229
                $region67: #{tpu_custom_call.1} parent=54 // loop_footer
                  %s212 = sadd.s32 1, %s208
                $region68: #{tpu_custom_call.1} parent=54 // loop_footer_branch
                  %207 = sbr.rel target = $region64
                $region69: #{tpu_custom_call.1} parent=54 // loop_exit
                  _
              $region55: #{tpu_custom_call.1} parent=39 // pred_fallthru
                _
            $region40: #{tpu_custom_call.1} parent=35 // pred_fallthru
              _
            // Predicated region
            $region41: #{tpu_custom_call.1} parent=35 // pred_check
              _
            $region42: #{tpu_custom_call.1} parent=35 // pred_check_branch
              %168 = sbr.rel (0) target = $region44
            $region43: #{tpu_custom_call.1} parent=35 // pred_region
              %s170 = ssub.s32 16, 1
              loop: start=0, step=1, limit=1
              $region45: #{tpu_custom_call.1} parent=43 // loop_pre_header
                _
              $region46: #{tpu_custom_call.1} parent=43 // loop_header
                %s172 = sphi 0, %s176
                %p173 = scmp.ge.s32.totalorder %s172, 1
                %s177 = sphi %s162, %s162
                %s178 = sphi %s159, %s159
              $region47: #{tpu_custom_call.1} parent=43 // loop_header_branch
                %175 = sbr.rel (%p173) target = $region51
              $region48: #{tpu_custom_call.1} parent=43 // loop_body
                %v179 = vld [vmem:[%s177] sm:%s170]
                %180 = vst [vmem:[%s178] sm:%s170] %v179
                %v181 = vld [vmem:[%s177 + $0x4] sm:%s170]
                %182 = vst [vmem:[%s178 + $0x4] sm:%s170] %v181
                %v183 = vld [vmem:[%s177 + $0x10] sm:%s170]
                %184 = vst [vmem:[%s178 + $0x8] sm:%s170] %v183
                %v185 = vld [vmem:[%s177 + $0x14] sm:%s170]
                %186 = vst [vmem:[%s178 + $0xc] sm:%s170] %v185
                %v187 = vld [vmem:[%s177 + $0x20] sm:%s170]
                %188 = vst [vmem:[%s178 + $0x10] sm:%s170] %v187
                %v189 = vld [vmem:[%s177 + $0x24] sm:%s170]
                %190 = vst [vmem:[%s178 + $0x14] sm:%s170] %v189
                %v191 = vld [vmem:[%s177 + $0x30] sm:%s170]
                %192 = vst [vmem:[%s178 + $0x18] sm:%s170] %v191
                %v193 = vld [vmem:[%s177 + $0x34] sm:%s170]
                %194 = vst [vmem:[%s178 + $0x1c] sm:%s170] %v193
              $region49: #{tpu_custom_call.1} parent=43 // loop_footer
                %s176 = sadd.s32 1, %s172
              $region50: #{tpu_custom_call.1} parent=43 // loop_footer_branch
                %171 = sbr.rel target = $region46
              $region51: #{tpu_custom_call.1} parent=43 // loop_exit
                _
            $region44: #{tpu_custom_call.1} parent=35 // pred_fallthru
              _
          $region36: #{tpu_custom_call.1} parent=31 // pred_fallthru
            _
          %231 = vnop
        $region32: #{tpu_custom_call.1} parent=27 // pred_fallthru
          _
      $region28: #{tpu_custom_call.1} parent=5 // pred_fallthru
        _
      %p232 = scmp.le.s32.totalorder 1, %s10
      %p233 = scmp.lt.s32.totalorder %s10, 3
      %p234 = pnand %p232, %p233
      %p235 = pneg %p234
      // Predicated region
      $region70: #{tpu_custom_call.1} parent=5 // pred_check
        _
      $region71: #{tpu_custom_call.1} parent=5 // pred_check_branch
        %237 = sbr.rel (%p234) target = $region73
      $region72: #{tpu_custom_call.1} parent=5 // pred_region
        %s238 = ssub.s32 %s10, 1
        %s239 = sand.u32 %s23, 1
        %s240 = sand.u32 %s23, 1
        %s241 = smul.addr %s240, 32
        %s242 = scalar_lea.vmem [#allocation2], %s241
        // Predicated region
        $region74: #{tpu_custom_call.1} parent=72 // pred_check
          %p243 = pneg %p36
        $region75: #{tpu_custom_call.1} parent=72 // pred_check_branch
          %245 = sbr.rel (%p243) target = $region77
        $region76: #{tpu_custom_call.1} parent=72 // pred_region
          _
        $region77: #{tpu_custom_call.1} parent=72 // pred_fallthru
          _
        %s246 = sand.u32 %s23, 1
        %s247 = sand.u32 %s23, 1
        %s248 = smul.addr %s247, 32
        %s249 = scalar_lea.vmem [#allocation2], %s248
        %p250 = pneg %p36
        %p251 = pneg %p33
        %p252 = pneg %p57
        %p253 = pneg %p54
        %p254 = pneg %p78
        %p255 = pneg %p75
        %p256 = pneg %p99
        %p257 = pneg %p96
        %p258 = pneg %p125
        %p259 = pneg %p122
        %p260 = scmp.lt.s32.totalorder %s15, 1
        %s261 = scalar_select %p260, %s15, 1
        %s262 = smul.addr %s261, 4
        %s263 = scalar_lea.vmem %s4, %s262
        %s264 = smul.u32 2, %s15
        %p265 = scmp.lt.s32.totalorder %s15, 1
        %s266 = scalar_select %p265, %s15, 1
        %s267 = smul.addr %s266, 4
        %s268 = scalar_lea.vmem %s4, %s267
        %v270 = vld [vmem:[%s242] sm:$0xf]
        %v271 = vld [vmem:[%s242 + $0x4] sm:$0xf]
        %v272 = vld [vmem:[%s242 + $0x8] sm:$0xf]
        %v273 = vld [vmem:[%s242 + $0xc] sm:$0xf]
        %v274 = vld [vmem:[%s242 + $0x10] sm:$0xf]
        %v275 = vld [vmem:[%s242 + $0x14] sm:$0xf]
        %v276 = vld [vmem:[%s242 + $0x18] sm:$0xf]
        %v277 = vld [vmem:[%s242 + $0x1c] sm:$0xf]
        %v278 = vld [vmem:[%s1] sm:$0xf]
        %v279 = vld [vmem:[%s1 + $0x4] sm:$0xf]
        %v280 = vld [vmem:[%s2] sm:$0x1]
        %v282 = vlaneseq
        %v283 = vshrl.u32 %v282, 7
        %v284 = vsub.s32 0, %v283
        %v285 = vrot.slane %v280, %v284
        %v295 = vunpack.c.l.b16 %v270
        %v296 = vunpack.c.l.b16 %v271
        %v297 = vunpack.c.l.b16 %v272
        %v298 = vunpack.c.l.b16 %v273
        %v299 = vunpack.c.l.b16 %v274
        %v300 = vunpack.c.l.b16 %v275
        %v301 = vunpack.c.l.b16 %v276
        %v302 = vunpack.c.l.b16 %v277
        %v303 = vpack.c.b16 %v296, %v295
        %v304 = vpack.c.b16 %v298, %v297
        %v305 = vpack.c.b16 %v300, %v299
        %v306 = vpack.c.b16 %v302, %v301
        %v309 = vunpack.c.l.b16 %v278
        %v310 = vunpack.c.l.b16 %v279
        %v311 = vpack.c.b16 %v310, %v309
        %vm313 = vcmask 130048
        %v315 = vsel %vm313, %v303, 0
        %v318 = vsel %vm313, %v304, 0
        %v321 = vsel %vm313, %v305, 0
        %v324 = vsel %vm313, %v306, 0
        %326 = vmatprep.subr.bf16.mxu0 0
        %327 = vmatpush1.bf16.msra.mxu0 0
        %328 = vmatprep.subr.bf16.mxu0 0
        %329 = vmatpush1.bf16.msra.mxu0 0
        %330 = vmatprep.subr.bf16.mxu0 0
        %331 = vmatpush1.bf16.msra.mxu0 0
        %332 = vmatprep.subr.bf16.mxu0 0
        %333 = vmatpush1.bf16.msra.mxu0 0
        %334 = vmatprep.subr.bf16.mxu0 0
        %335 = vmatpush1.bf16.msra.mxu0 0
        %336 = vmatprep.subr.bf16.mxu0 0
        %337 = vmatpush1.bf16.msra.mxu0 0
        %338 = vmatprep.subr.bf16.mxu0 0
        %339 = vmatpush1.bf16.msra.mxu0 0
        %340 = vmatprep.subr.bf16.mxu0 0
        %341 = vmatpush1.bf16.msra.mxu0 %v311
        %342 = vmatprep.subr.bf16.mxu0 0
        %343 = vmatpush2.bf16.msra.mxu0 0
        %344 = vmatprep.subr.bf16.mxu0 0
        %345 = vmatpush2.bf16.msra.mxu0 0
        %346 = vmatprep.subr.bf16.mxu0 0
        %347 = vmatpush2.bf16.msra.mxu0 0
        %348 = vmatprep.subr.bf16.mxu0 0
        %349 = vmatpush2.bf16.msra.mxu0 0
        %350 = vmatprep.subr.bf16.mxu0 0
        %351 = vmatpush2.bf16.msra.mxu0 0
        %352 = vmatprep.subr.bf16.mxu0 0
        %353 = vmatpush2.bf16.msra.mxu0 0
        %354 = vmatprep.subr.bf16.mxu0 0
        %355 = vmatpush2.bf16.msra.mxu0 0
        %356 = vmatprep.subr.bf16.mxu0 0
        %357 = vmatpush2.bf16.msra.mxu0 0
        %358 = vmatprep.mubr.bf16.mxu0 0
        %359 = vmatmul.mubr.bf16.gmra.mxu0 %v315
        %v360 = vpop.f32.mrf.mxu0
        %v361 = vadd.f32 %v285, %v360
        %v362 = vpop.f32.mrf.mxu0
        %v363 = vpop.f32.mrf.mxu0
        %v364 = vadd.f32 %v285, %v363
        %v365 = vpop.f32.mrf.mxu0
        %366 = vmatprep.mubr.bf16.mxu0 0
        %367 = vmatmul.mubr.bf16.gmra.mxu0 %v318
        %v368 = vpop.f32.mrf.mxu0
        %v369 = vadd.f32 %v285, %v368
        %v370 = vpop.f32.mrf.mxu0
        %v371 = vpop.f32.mrf.mxu0
        %v372 = vadd.f32 %v285, %v371
        %v373 = vpop.f32.mrf.mxu0
        %374 = vmatprep.mubr.bf16.mxu0 0
        %375 = vmatmul.mubr.bf16.gmra.mxu0 %v321
        %v376 = vpop.f32.mrf.mxu0
        %v377 = vadd.f32 %v285, %v376
        %v378 = vpop.f32.mrf.mxu0
        %v379 = vpop.f32.mrf.mxu0
        %v380 = vadd.f32 %v285, %v379
        %v381 = vpop.f32.mrf.mxu0
        %382 = vmatprep.mubr.bf16.mxu0 0
        %383 = vmatmul.mubr.bf16.gmra.mxu0 %v324
        %v384 = vpop.f32.mrf.mxu0
        %v385 = vadd.f32 %v285, %v384
        %v386 = vpop.f32.mrf.mxu0
        %v387 = vpop.f32.mrf.mxu0
        %v388 = vadd.f32 %v285, %v387
        %v389 = vpop.f32.mrf.mxu0
        %390 = vdwg.mxu0
        %v391 = vtanh.pop %v361
        %v392 = vtanh.pop %v364
        %v393 = vtanh.pop %v369
        %v394 = vtanh.pop %v372
        %v395 = vtanh.pop %v377
        %v396 = vtanh.pop %v380
        %v397 = vtanh.pop %v385
        %v398 = vtanh.pop %v388
        %s399 = smul.u32 %s15, 16
        %v400 = vlaneseq
        %v401 = vshrl.u32 %v400, 7
        %v402 = vadd.s32 %v401, 8
        %v403 = vstv %s399
        %v404 = vadd.s32 %v403, %v401
        %v405 = vadd.s32 %v403, %v402
        %vm406 = vcmp.lt.s32.totalorder %v404, 24
        %vm407 = vcmp.lt.s32.totalorder %v405, 24
        %v408 = vsel %vm406, 1, 0
        %v409 = vsel %vm407, 1, 0
        %vm410 = vcmp.eq.s32.totalorder %v408, 1
        %vm411 = vcmp.eq.s32.totalorder %v409, 1
        %v412 = vsel %vm410, %v391, 0.0
        %v413 = vsel %vm411, %v392, 0.0
        %v414 = vsel %vm410, %v393, 0.0
        %v415 = vsel %vm411, %v394, 0.0
        %v416 = vsel %vm410, %v395, 0.0
        %v417 = vsel %vm411, %v396, 0.0
        %v418 = vsel %vm410, %v397, 0.0
        %v419 = vsel %vm411, %v398, 0.0
        %v420 = vadd.f32 %v412, %v413
        %v421 = vrot.slane %v420, 4
        %v422 = vadd.f32 %v420, %v421
        %v423 = vrot.slane %v422, 2
        %v424 = vadd.f32 %v422, %v423
        %v425 = vrot.slane %v424, 1
        %v426 = vadd.f32 %v424, %v425
        %v427 = vadd.f32 %v414, %v415
        %v428 = vrot.slane %v427, 4
        %v429 = vadd.f32 %v427, %v428
        %v430 = vrot.slane %v429, 2
        %v431 = vadd.f32 %v429, %v430
        %v432 = vrot.slane %v431, 1
        %v433 = vadd.f32 %v431, %v432
        %v434 = vadd.f32 %v416, %v417
        %v435 = vrot.slane %v434, 4
        %v436 = vadd.f32 %v434, %v435
        %v437 = vrot.slane %v436, 2
        %v438 = vadd.f32 %v436, %v437
        %v439 = vrot.slane %v438, 1
        %v440 = vadd.f32 %v438, %v439
        %v441 = vadd.f32 %v418, %v419
        %v442 = vrot.slane %v441, 4
        %v443 = vadd.f32 %v441, %v442
        %v444 = vrot.slane %v443, 2
        %v445 = vadd.f32 %v443, %v444
        %v446 = vrot.slane %v445, 1
        %v447 = vadd.f32 %v445, %v446
        %v448 = vld [vmem:[%s3] sm:$0x1]
        %v450 = vlaneseq
        %v451 = vshrl.u32 %v450, 7
        %v452 = vsub.s32 0, %v451
        %v453 = vrot.slane %v448, %v452
        %v455 = vmul.f32 %v426, %v453
        %v456 = vmul.f32 %v433, %v453
        %v457 = vmul.f32 %v440, %v453
        %v458 = vmul.f32 %v447, %v453
        %v463 = vrot.slane %v456, 7
        %vm464 = vcmask 1041409
        %v465 = vsel %vm464, %v463, %v455
        %v466 = vrot.slane %v457, 6
        %vm467 = vcmask 1042434
        %v468 = vsel %vm467, %v466, %v465
        %v469 = vrot.slane %v458, 5
        %vm470 = vcmask 1043459
        %v471 = vsel %vm470, %v469, %v468
        %vm473 = vcmask 1043456
        %v474 = vsel %vm473, %v471, 0.0
        %475 = vadd.xlane.f32.xlu0 %v474
        %v476 = vpop.xlane.xlu0 %475
        %vm477 = vcmask 3072
        %478 = vst.msk [vmem:[%s268] sm:$0xf] %vm477, %v476
        %p479 = scmp.lt.s32.totalorder %s15, 1
        %s480 = scalar_select %p479, %s15, 1
        %s481 = smul.addr %s480, 4
        %s482 = scalar_lea.vmem %s4, %s481
        // Predicated region
        $region78: #{tpu_custom_call.1} parent=72 // pred_check
          %p483 = pneg %p122
        $region79: #{tpu_custom_call.1} parent=72 // pred_check_branch
          %485 = sbr.rel (%p483) target = $region81
        $region80: #{tpu_custom_call.1} parent=72 // pred_region
          _
        $region81: #{tpu_custom_call.1} parent=72 // pred_fallthru
          _
      $region73: #{tpu_custom_call.1} parent=5 // pred_fallthru
        _
      %p486 = scmp.le.s32.totalorder 2, %s10
      // Predicated region
      $region82: #{tpu_custom_call.1} parent=5 // pred_check
        %p487 = pneg %p486
      $region83: #{tpu_custom_call.1} parent=5 // pred_check_branch
        %489 = sbr.rel (%p487) target = $region85
      $region84: #{tpu_custom_call.1} parent=5 // pred_region
        %s490 = ssub.s32 %s10, 2
        // Predicated region
        $region86: #{tpu_custom_call.1} parent=84 // pred_check
          %p491 = pneg %p128
        $region87: #{tpu_custom_call.1} parent=84 // pred_check_branch
          %493 = sbr.rel (%p491) target = $region89
        $region88: #{tpu_custom_call.1} parent=84 // pred_region
          %p494 = scmp.lt.s32.totalorder %s16, 1
          %s495 = scalar_select %p494, %s16, 1
          %s496 = smul.addr %s495, 4
          %s497 = scalar_lea.vmem %s4, %s496
        $region89: #{tpu_custom_call.1} parent=84 // pred_fallthru
          _
      $region85: #{tpu_custom_call.1} parent=5 // pred_fallthru
        _
    $region6: #{tpu_custom_call.1} parent=1 // loop_footer
      %s14 = sadd.s32 1, %s10
    $region7: #{tpu_custom_call.1} parent=1 // loop_footer_branch
      %9 = sbr.rel target = $region3
    $region8: #{tpu_custom_call.1} parent=1 // loop_exit
      _

</llo_original>
